<compile_context>
chip_gen: v5e
topology: v5e:2x2
jax: 0.10.0
libtpu: 0.0.40
codegen_flags: <defaults>
</compile_context>

<pallas_src>
import functools

import jax
import jax.numpy as jnp
from jax.experimental import pallas as pl
from jax.experimental.pallas import tpu as pltpu

_LANE = 128      # vreg lane width
_SUBLANE = 8     # f32 sublane count


def _round_up(n, m):
    return ((n + m - 1) // m) * m


# ----------------------------------------------------------------------------
# Kernel: whole MLP for one batch tile.  Weights/biases are resident in VMEM
# across the batch grid (their index_map always returns block (0, 0)).
# ----------------------------------------------------------------------------
def _mlp_kernel(x_ref, w1_ref, b1_ref, w2_ref, b2_ref, w3_ref, b3_ref, o_ref):
    x = x_ref[...]                                                     # [TB, I]
    h1 = jnp.dot(x, w1_ref[...], preferred_element_type=jnp.float32) + b1_ref[...]
    h2 = jnp.dot(h1, w2_ref[...], preferred_element_type=jnp.float32) + b2_ref[...]
    h2 = jnp.maximum(h2, 0.0)      # ReLU only after fc2 (matches PyTorch forward)
    o_ref[...] = jnp.dot(h2, w3_ref[...], preferred_element_type=jnp.float32) + b3_ref[...]


# ----------------------------------------------------------------------------
# One-time parameter preparation: transpose to [in, out] and zero-pad the
# hidden/output feature dims up to 128 lanes.  Zero padding is exact: padded
# lanes carry zero activations/biases end-to-end, and the wrapper slices them
# off the final output.
# ----------------------------------------------------------------------------
def prepare_params(params):
    w1, b1 = params["w1"], params["b1"]   # [H, I], [H]   (PyTorch convention)
    w2, b2 = params["w2"], params["b2"]   # [H, H], [H]
    w3, b3 = params["w3"], params["b3"]   # [O, H], [O]

    H, I = w1.shape
    O = w3.shape[0]
    HP = _round_up(H, _LANE)
    OP = _round_up(O, _LANE)

    def pad2(a, rows, cols):
        out = jnp.zeros((rows, cols), jnp.float32)
        return out.at[: a.shape[0], : a.shape[1]].set(a.astype(jnp.float32))

    prepared_arrays = (
        pad2(w1.T, I, HP),                                             # [I,  HP]
        jnp.zeros((1, HP), jnp.float32).at[0, :H].set(b1),             # [1,  HP]
        pad2(w2.T, HP, HP),                                            # [HP, HP]
        jnp.zeros((1, HP), jnp.float32).at[0, :H].set(b2),             # [1,  HP]
        pad2(w3.T, HP, OP),                                            # [HP, OP]
        jnp.zeros((1, OP), jnp.float32).at[0, :O].set(b3),             # [1,  OP]
    )
    return {"arrays": prepared_arrays, "input_size": I,
            "hidden_size": H, "output_size": O}


# ----------------------------------------------------------------------------
# Forward wrapper.
# ----------------------------------------------------------------------------
@functools.partial(jax.jit, static_argnums=(2, 3))
def _forward_jit(x, arrays, out_size, tile_b):
    w1t, b1, w2t, b2, w3t, b3 = arrays
    B, I = x.shape
    HP = w1t.shape[1]
    OP = w3t.shape[1]

    # Batch tiling: pad B to a sublane multiple, clamp the tile to the padded
    # batch, then pad the batch to a whole number of tiles.
    b_pad = _round_up(max(B, _SUBLANE), _SUBLANE)
    tb = _round_up(min(tile_b, b_pad), _SUBLANE)
    b_pad = _round_up(b_pad, tb)
    if b_pad != B:
        x = jnp.pad(x, ((0, b_pad - B), (0, 0)))

    grid = (b_pad // tb,)

    flops = 2 * b_pad * (I * HP + HP * HP + HP * OP)
    bytes_accessed = 4 * (b_pad * I + I * HP + HP * HP + HP * OP
                          + 2 * HP + OP + b_pad * OP)
    cost = pl.CostEstimate(flops=flops, transcendentals=0,
                           bytes_accessed=bytes_accessed)

    # VMEM budget: double-buffered x/out tiles + resident weights/biases +
    # f32 intermediates; 2x headroom, capped well below v7x's 64 MiB per TC.
    vmem_bytes = 4 * (2 * tb * I + 2 * tb * OP + I * HP + HP * HP + HP * OP
                      + 2 * HP + OP + 3 * tb * HP)
    vmem_limit = int(min(max(2 * vmem_bytes, 4 << 20), 48 << 20))

    out_padded = pl.pallas_call(
        _mlp_kernel,
        out_shape=jax.ShapeDtypeStruct((b_pad, OP), jnp.float32),
        grid_spec=pltpu.PrefetchScalarGridSpec(
            num_scalar_prefetch=0,
            grid=grid,
            in_specs=[
                pl.BlockSpec((tb, I), lambda i: (i, 0)),    # x tile, streamed
                pl.BlockSpec((I, HP), lambda i: (0, 0)),    # w1 resident
                pl.BlockSpec((1, HP), lambda i: (0, 0)),    # b1 resident
                pl.BlockSpec((HP, HP), lambda i: (0, 0)),   # w2 resident
                pl.BlockSpec((1, HP), lambda i: (0, 0)),    # b2 resident
                pl.BlockSpec((HP, OP), lambda i: (0, 0)),   # w3 resident
                pl.BlockSpec((1, OP), lambda i: (0, 0)),    # b3 resident
            ],
            out_specs=pl.BlockSpec((tb, OP), lambda i: (i, 0)),  # lane-dense out
        ),
        compiler_params=pltpu.CompilerParams(
            dimension_semantics=("parallel",),
            vmem_limit_bytes=vmem_limit,
        ),
        cost_estimate=cost,
    )(x, w1t, b1, w2t, b2, w3t, b3)

    return out_padded[:B, :out_size]


def performance_net_forward(x, prepared, tile_b=512):
    """x: [B, input_size] float32. prepared: output of prepare_params()."""
    # NOTE: at tiny shapes (B=16, dims 5/10/8) this call is launch-overhead
    # bound; the Pallas path pays off once B (and ideally the feature dims)
    # are large enough to amortize the ~0.35 us per-step overhead.
    return _forward_jit(x, prepared["arrays"], prepared["output_size"], tile_b)


# ----------------------------------------------------------------------------
# Deterministic init (mimics nn.Linear default U[-1/sqrt(fan_in), 1/sqrt(fan_in)])
# and a pure-JAX reference for correctness checking.
# ----------------------------------------------------------------------------
def init_params(key, input_size=5, hidden_size=10, output_size=8):
    ks = jax.random.split(key, 6)

    def lin(kw, kb, fan_in, fan_out):
        bound = 1.0 / jnp.sqrt(jnp.float32(fan_in))
        w = jax.random.uniform(kw, (fan_out, fan_in), jnp.float32, -bound, bound)
        b = jax.random.uniform(kb, (fan_out,), jnp.float32, -bound, bound)
        return w, b

    w1, b1 = lin(ks[0], ks[1], input_size, hidden_size)
    w2, b2 = lin(ks[2], ks[3], hidden_size, hidden_size)
    w3, b3 = lin(ks[4], ks[5], hidden_size, output_size)
    return {"w1": w1, "b1": b1, "w2": w2, "b2": b2, "w3": w3, "b3": b3}


def reference_forward(x, p):
    h1 = x @ p["w1"].T + p["b1"]
    h2 = h1 @ p["w2"].T + p["b2"]
    h2 = jnp.maximum(h2, 0.0)
    return h2 @ p["w3"].T + p["b3"]


if __name__ == "__main__":
    key = jax.random.PRNGKey(0)
    k_param, k_x = jax.random.split(key)

    input_size, hidden_size, output_size = 5, 10, 8
    batch = 16

    params = init_params(k_param, input_size, hidden_size, output_size)
    prepared = prepare_params(params)  # one-time pad + transpose (off hot path)

    x = jax.random.normal(k_x, (batch, input_size), jnp.float32)

    out = performance_net_forward(x, prepared)
    jax.block_until_ready(out)

    ref = reference_forward(x, params)
    assert out.shape == (batch, output_size)
    assert jnp.allclose(out, ref, atol=1e-5, rtol=1e-5)

    print("KERNEL_OK")
</pallas_src>

<mosaic_0001>
module attributes {stable_mosaic.version = 11 : i64} {
  func.func @_mlp_kernel(%arg0: i32, %arg1: memref<16x5xf32, #tpu.memory_space<vmem>>, %arg2: memref<5x128xf32, #tpu.memory_space<vmem>>, %arg3: memref<1x128xf32, #tpu.memory_space<vmem>>, %arg4: memref<128x128xf32, #tpu.memory_space<vmem>>, %arg5: memref<1x128xf32, #tpu.memory_space<vmem>>, %arg6: memref<128x128xf32, #tpu.memory_space<vmem>>, %arg7: memref<1x128xf32, #tpu.memory_space<vmem>>, %arg8: memref<16x128xf32, #tpu.memory_space<vmem>>) attributes {dimension_semantics = [#tpu.dimension_semantics<parallel>], iteration_bounds = array<i64: 1>, scalar_prefetch = 0 : i64, scratch_operands = 0 : i64, tpu.core_type = #tpu.core_type<tc>, window_params = [{transform_indices = @transform_0, window_bounds = array<i64: 16, 5>}, {pipeline_mode = #tpu.pipeline_mode<synchronous>, transform_indices = @transform_1, window_bounds = array<i64: 5, 128>}, {pipeline_mode = #tpu.pipeline_mode<synchronous>, transform_indices = @transform_2, window_bounds = array<i64: 1, 128>}, {pipeline_mode = #tpu.pipeline_mode<synchronous>, transform_indices = @transform_3, window_bounds = array<i64: 128, 128>}, {pipeline_mode = #tpu.pipeline_mode<synchronous>, transform_indices = @transform_4, window_bounds = array<i64: 1, 128>}, {pipeline_mode = #tpu.pipeline_mode<synchronous>, transform_indices = @transform_5, window_bounds = array<i64: 128, 128>}, {pipeline_mode = #tpu.pipeline_mode<synchronous>, transform_indices = @transform_6, window_bounds = array<i64: 1, 128>}, {transform_indices = @transform_7, window_bounds = array<i64: 16, 128>}]} {
    %c0 = arith.constant 0 : index
    %c0_0 = arith.constant 0 : index
    %0 = vector.load %arg1[%c0, %c0_0] : memref<16x5xf32, #tpu.memory_space<vmem>>, vector<16x5xf32>
    %c0_1 = arith.constant 0 : index
    %c0_2 = arith.constant 0 : index
    %1 = vector.load %arg2[%c0_1, %c0_2] : memref<5x128xf32, #tpu.memory_space<vmem>>, vector<5x128xf32>
    %cst = arith.constant dense<0.000000e+00> : vector<16x128xf32>
    %2 = tpu.matmul %0, %1, %cst {dimension_numbers = #tpu.dot_dimension_numbers<[1], [0], [0], [1], [0, 0, 1, 1], [], []>} : vector<16x5xf32>, vector<5x128xf32>, vector<16x128xf32> -> vector<16x128xf32>
    %c0_3 = arith.constant 0 : index
    %c0_4 = arith.constant 0 : index
    %3 = vector.load %arg3[%c0_3, %c0_4] : memref<1x128xf32, #tpu.memory_space<vmem>>, vector<1x128xf32>
    %4 = vector.broadcast %3 : vector<1x128xf32> to vector<16x128xf32>
    %5 = arith.addf %2, %4 : vector<16x128xf32>
    %c0_5 = arith.constant 0 : index
    %c0_6 = arith.constant 0 : index
    %6 = vector.load %arg4[%c0_5, %c0_6] : memref<128x128xf32, #tpu.memory_space<vmem>>, vector<128x128xf32>
    %cst_7 = arith.constant dense<0.000000e+00> : vector<16x128xf32>
    %7 = tpu.matmul %5, %6, %cst_7 {dimension_numbers = #tpu.dot_dimension_numbers<[1], [0], [0], [1], [0, 0, 1, 1], [], []>} : vector<16x128xf32>, vector<128x128xf32>, vector<16x128xf32> -> vector<16x128xf32>
    %c0_8 = arith.constant 0 : index
    %c0_9 = arith.constant 0 : index
    %8 = vector.load %arg5[%c0_8, %c0_9] : memref<1x128xf32, #tpu.memory_space<vmem>>, vector<1x128xf32>
    %9 = vector.broadcast %8 : vector<1x128xf32> to vector<16x128xf32>
    %10 = arith.addf %7, %9 : vector<16x128xf32>
    %cst_10 = arith.constant 0.000000e+00 : f32
    %11 = vector.broadcast %cst_10 : f32 to vector<16x128xf32>
    %12 = arith.maximumf %10, %11 : vector<16x128xf32>
    %c0_11 = arith.constant 0 : index
    %c0_12 = arith.constant 0 : index
    %13 = vector.load %arg6[%c0_11, %c0_12] : memref<128x128xf32, #tpu.memory_space<vmem>>, vector<128x128xf32>
    %cst_13 = arith.constant dense<0.000000e+00> : vector<16x128xf32>
    %14 = tpu.matmul %12, %13, %cst_13 {dimension_numbers = #tpu.dot_dimension_numbers<[1], [0], [0], [1], [0, 0, 1, 1], [], []>} : vector<16x128xf32>, vector<128x128xf32>, vector<16x128xf32> -> vector<16x128xf32>
    %c0_14 = arith.constant 0 : index
    %c0_15 = arith.constant 0 : index
    %15 = vector.load %arg7[%c0_14, %c0_15] : memref<1x128xf32, #tpu.memory_space<vmem>>, vector<1x128xf32>
    %16 = vector.broadcast %15 : vector<1x128xf32> to vector<16x128xf32>
    %17 = arith.addf %14, %16 : vector<16x128xf32>
    %c0_16 = arith.constant 0 : index
    %c0_17 = arith.constant 0 : index
    %18 = vector.load %arg8[%c0_16, %c0_17] : memref<16x128xf32, #tpu.memory_space<vmem>>, vector<16x128xf32>
    tpu.vector_store %arg8[%c0_16, %c0_17], %17 {strides = array<i32>} : memref<16x128xf32, #tpu.memory_space<vmem>>, vector<16x128xf32>,
    return
  }
  func.func @transform_0(%arg0: i32) -> (i32, i32) {
    %c0_i32 = arith.constant 0 : i32
    %c0_i32_0 = arith.constant 0 : i32
    return %arg0, %c0_i32 : i32, i32
  }
  func.func @transform_1(%arg0: i32) -> (i32, i32) {
    %c0_i32 = arith.constant 0 : i32
    %c0_i32_0 = arith.constant 0 : i32
    %c0_i32_1 = arith.constant 0 : i32
    return %c0_i32, %c0_i32_0 : i32, i32
  }
  func.func @transform_2(%arg0: i32) -> (i32, i32) {
    %c0_i32 = arith.constant 0 : i32
    %c0_i32_0 = arith.constant 0 : i32
    %c0_i32_1 = arith.constant 0 : i32
    return %c0_i32, %c0_i32_0 : i32, i32
  }
  func.func @transform_3(%arg0: i32) -> (i32, i32) {
    %c0_i32 = arith.constant 0 : i32
    %c0_i32_0 = arith.constant 0 : i32
    %c0_i32_1 = arith.constant 0 : i32
    return %c0_i32, %c0_i32_0 : i32, i32
  }
  func.func @transform_4(%arg0: i32) -> (i32, i32) {
    %c0_i32 = arith.constant 0 : i32
    %c0_i32_0 = arith.constant 0 : i32
    %c0_i32_1 = arith.constant 0 : i32
    return %c0_i32, %c0_i32_0 : i32, i32
  }
  func.func @transform_5(%arg0: i32) -> (i32, i32) {
    %c0_i32 = arith.constant 0 : i32
    %c0_i32_0 = arith.constant 0 : i32
    %c0_i32_1 = arith.constant 0 : i32
    return %c0_i32, %c0_i32_0 : i32, i32
  }
  func.func @transform_6(%arg0: i32) -> (i32, i32) {
    %c0_i32 = arith.constant 0 : i32
    %c0_i32_0 = arith.constant 0 : i32
    %c0_i32_1 = arith.constant 0 : i32
    return %c0_i32, %c0_i32_0 : i32, i32
  }
  func.func @transform_7(%arg0: i32) -> (i32, i32) {
    %c0_i32 = arith.constant 0 : i32
    %c0_i32_0 = arith.constant 0 : i32
    return %arg0, %c0_i32 : i32, i32
  }
}

</mosaic_0001>

<llo_original>
// kernel: _forward_jit.1
$region0: #{_forward_jit.1}
  #allocation0 [shape = 'u32[]', space=smem, size = 0x4, offset = 0x4, fixed_abs, tag = 'smem constant byte address 0x4 - core index']
  #allocation1 [shape = 'u32[72,128]{1,0:T(1,128)}', space=vmem, size = 0x9000, scoped, tag = 'internal scratch']
  %s0 = inlined_call_operand.vmem [shape: f32[16,5], index: 0, kind: input, shape index: {}]
  %s1 = inlined_call_operand.vmem [shape: f32[5,128], index: 1, kind: input, shape index: {}]
  %s2 = inlined_call_operand.vmem [shape: f32[1,128], index: 2, kind: input, shape index: {}]
  %s3 = inlined_call_operand.hbm [shape: f32[128,128], index: 3, kind: input, shape index: {}]
  %s4 = inlined_call_operand.vmem [shape: f32[1,128], index: 4, kind: input, shape index: {}]
  %s5 = inlined_call_operand.hbm [shape: f32[128,128], index: 5, kind: input, shape index: {}]
  %s6 = inlined_call_operand.vmem [shape: f32[1,128], index: 6, kind: input, shape index: {}]
  %s7 = inlined_call_operand.vmem [shape: f32[16,128], index: 7, kind: output, shape index: {}]
  %s8 = sld [smem:[#allocation0]]
  $region46: #{_forward_jit.1} parent=0
    _
  %s10 = ssub.s32 1, %s8
  %s11 = scalar_select 0, %s10, %s8
  $region1: #{_forward_jit.1} parent=0
    #allocation2 [shape = 'u8[65536]{0}', space=vmem, size = 0x10000, scoped, tag = 'input window, operand 3, single buffered']
    #allocation3 [shape = 's32[1]{0}', space=sflag, size = 0x4, scoped, tag = 'scoped memory for _forward_jit.1']
    #allocation4 [shape = 'u8[65536]{0}', space=vmem, size = 0x10000, scoped, tag = 'input window, operand 5, single buffered']
    #allocation5 [shape = 's32[1]{0}', space=sflag, size = 0x4, scoped, tag = 'scoped memory for _forward_jit.1']
    %12 = vsyncpa [#allocation3], 0
    %13 = vsyncpa [#allocation5], 0
    // Predicated region
    $region2: #{_forward_jit.1} parent=1 // pred_check
      _
    $region3: #{_forward_jit.1} parent=1 // pred_check_branch
      %15 = sbr.rel (0) target = $region5
    $region4: #{_forward_jit.1} parent=1 // pred_region
      _
    $region5: #{_forward_jit.1} parent=1 // pred_fallthru
      _
    // Predicated region
    $region6: #{_forward_jit.1} parent=1 // pred_check
      _
    $region7: #{_forward_jit.1} parent=1 // pred_check_branch
      %17 = sbr.rel (0) target = $region9
    $region8: #{_forward_jit.1} parent=1 // pred_region
      _
    $region9: #{_forward_jit.1} parent=1 // pred_fallthru
      _
    // Predicated region
    $region10: #{_forward_jit.1} parent=1 // pred_check
      _
    $region11: #{_forward_jit.1} parent=1 // pred_check_branch
      %19 = sbr.rel (0) target = $region13
    $region12: #{_forward_jit.1} parent=1 // pred_region
      _
    $region13: #{_forward_jit.1} parent=1 // pred_fallthru
      _
    // Predicated region
    $region14: #{_forward_jit.1} parent=1 // pred_check
      _
    $region15: #{_forward_jit.1} parent=1 // pred_check_branch
      %21 = sbr.rel (0) target = $region17
    $region16: #{_forward_jit.1} parent=1 // pred_region
      %23 = vsyncadd [#allocation3], 0
      %s24 = sshll.u32 %s3, 4
      %s25 = int_to_ptr.hbm [resolvable:$true] %s24
      %s26 = sshll.u32 [#allocation2], 4
      %s27 = int_to_ptr.vmem [resolvable:$true] %s26
      %32 = dma.hbm_to_vmem [thread:$0]  %s25, 2048, %s27, [#allocation3], 128, 128, 8
    $region17: #{_forward_jit.1} parent=1 // pred_fallthru
      _
    // Predicated region
    $region18: #{_forward_jit.1} parent=1 // pred_check
      _
    $region19: #{_forward_jit.1} parent=1 // pred_check_branch
      %34 = sbr.rel (0) target = $region21
    $region20: #{_forward_jit.1} parent=1 // pred_region
      _
    $region21: #{_forward_jit.1} parent=1 // pred_fallthru
      _
    // Predicated region
    $region22: #{_forward_jit.1} parent=1 // pred_check
      _
    $region23: #{_forward_jit.1} parent=1 // pred_check_branch
      %36 = sbr.rel (0) target = $region25
    $region24: #{_forward_jit.1} parent=1 // pred_region
      %38 = vsyncadd [#allocation5], 0
      %s39 = sshll.u32 %s5, 4
      %s40 = int_to_ptr.hbm [resolvable:$true] %s39
      %s41 = sshll.u32 [#allocation4], 4
      %s42 = int_to_ptr.vmem [resolvable:$true] %s41
      %47 = dma.hbm_to_vmem [thread:$0]  %s40, 2048, %s42, [#allocation5], 128, 128, 8
    $region25: #{_forward_jit.1} parent=1 // pred_fallthru
      _
    // Predicated region
    $region26: #{_forward_jit.1} parent=1 // pred_check
      _
    $region27: #{_forward_jit.1} parent=1 // pred_check_branch
      %49 = sbr.rel (0) target = $region29
    $region28: #{_forward_jit.1} parent=1 // pred_region
      _
    $region29: #{_forward_jit.1} parent=1 // pred_fallthru
      _
    // Predicated region
    $region30: #{_forward_jit.1} parent=1 // pred_check
      _
    $region31: #{_forward_jit.1} parent=1 // pred_check_branch
      %51 = sbr.rel (0) target = $region33
    $region32: #{_forward_jit.1} parent=1 // pred_region
      %53 = dma.done [#allocation3], 2048
    $region33: #{_forward_jit.1} parent=1 // pred_fallthru
      _
    // Predicated region
    $region34: #{_forward_jit.1} parent=1 // pred_check
      _
    $region35: #{_forward_jit.1} parent=1 // pred_check_branch
      %55 = sbr.rel (0) target = $region37
    $region36: #{_forward_jit.1} parent=1 // pred_region
      %57 = dma.done [#allocation5], 2048
    $region37: #{_forward_jit.1} parent=1 // pred_fallthru
      _
    %v58 = vld [vmem:[%s0] sm:$0xff]
    %v59 = vld [vmem:[%s0 + $0x8] sm:$0xff]
    %v60 = vld [vmem:[%s1] sm:$0x1f]
    %v61 = vld [vmem:[%s2] sm:$0x1]
    %v63 = vperm.slane %v61, 0
    %vm65 = vcmask 39936
    %v67 = vsel %vm65, %v58, 0
    %v70 = vsel %vm65, %v59, 0
    %vm72 = vcmask 1044480
    %v74 = vsel %vm72, %v60, 0
    %76 = vmatpush.msra.mxu0 0.0
    %77 = vmatpush.msra.mxu0 0.0
    %78 = vmatpush.msra.mxu0 0.0
    %79 = vmatpush.msra.mxu0 0.0
    %80 = vmatpush.msra.mxu0 0.0
    %81 = vmatpush.msra.mxu0 0.0
    %82 = vmatpush.msra.mxu0 0.0
    %83 = vmatpush.msra.mxu0 0.0
    %84 = vmatpush.msra.mxu0 0.0
    %85 = vmatpush.msra.mxu0 0.0
    %86 = vmatpush.msra.mxu0 0.0
    %87 = vmatpush.msra.mxu0 0.0
    %88 = vmatpush.msra.mxu0 0.0
    %89 = vmatpush.msra.mxu0 0.0
    %90 = vmatpush.msra.mxu0 0.0
    %91 = vmatpush.msra.mxu0 %v74
    %92 = vmatmul.f32.gmra.mxu0 %v67
    %v93 = vpop.f32.mrf.mxu0
    %v94 = vadd.f32 %v63, %v93
    %95 = vmatmul.f32.gmra.mxu0 %v70
    %v96 = vpop.f32.mrf.mxu0
    %v97 = vadd.f32 %v63, %v96
    %98 = vdwg.mxu0
    %v99 = vld [vmem:[#allocation2] sm:$0xff]
    %v100 = vld [vmem:[#allocation2 + $0x8] sm:$0xff]
    %v101 = vld [vmem:[#allocation2 + $0x10] sm:$0xff]
    %v102 = vld [vmem:[#allocation2 + $0x18] sm:$0xff]
    %v103 = vld [vmem:[#allocation2 + $0x20] sm:$0xff]
    %v104 = vld [vmem:[#allocation2 + $0x28] sm:$0xff]
    %v105 = vld [vmem:[#allocation2 + $0x30] sm:$0xff]
    %v106 = vld [vmem:[#allocation2 + $0x38] sm:$0xff]
    %v107 = vld [vmem:[#allocation2 + $0x40] sm:$0xff]
    %v108 = vld [vmem:[#allocation2 + $0x48] sm:$0xff]
    %v109 = vld [vmem:[#allocation2 + $0x50] sm:$0xff]
    %v110 = vld [vmem:[#allocation2 + $0x58] sm:$0xff]
    %v111 = vld [vmem:[#allocation2 + $0x60] sm:$0xff]
    %v112 = vld [vmem:[#allocation2 + $0x68] sm:$0xff]
    %v113 = vld [vmem:[#allocation2 + $0x70] sm:$0xff]
    %v114 = vld [vmem:[#allocation2 + $0x78] sm:$0xff]
    %v115 = vld [vmem:[%s4] sm:$0x1]
    %v117 = vperm.slane %v115, 0
    %119 = vmatpush.msra.mxu0 %v114
    %120 = vmatpush.msra.mxu0 %v113
    %121 = vmatpush.msra.mxu0 %v112
    %122 = vmatpush.msra.mxu0 %v111
    %123 = vmatpush.msra.mxu0 %v110
    %124 = vmatpush.msra.mxu0 %v109
    %125 = vmatpush.msra.mxu0 %v108
    %126 = vmatpush.msra.mxu0 %v107
    %127 = vmatpush.msra.mxu0 %v106
    %128 = vmatpush.msra.mxu0 %v105
    %129 = vmatpush.msra.mxu0 %v104
    %130 = vmatpush.msra.mxu0 %v103
    %131 = vmatpush.msra.mxu0 %v102
    %132 = vmatpush.msra.mxu0 %v101
    %133 = vmatpush.msra.mxu0 %v100
    %134 = vmatpush.msra.mxu0 %v99
    %135 = vmatmul.f32.gmra.mxu0 %v94
    %v136 = vpop.f32.mrf.mxu0
    %v137 = vadd.f32 %v117, %v136
    %138 = vmatmul.f32.gmra.mxu0 %v97
    %v139 = vpop.f32.mrf.mxu0
    %v140 = vadd.f32 %v117, %v139
    %141 = vdwg.mxu0
    %v142 = vmax.f32 %v137, 0.0
    %v143 = vmax.f32 %v140, 0.0
    %v144 = vld [vmem:[#allocation4] sm:$0xff]
    %v145 = vld [vmem:[#allocation4 + $0x8] sm:$0xff]
    %v146 = vld [vmem:[#allocation4 + $0x10] sm:$0xff]
    %v147 = vld [vmem:[#allocation4 + $0x18] sm:$0xff]
    %v148 = vld [vmem:[#allocation4 + $0x20] sm:$0xff]
    %v149 = vld [vmem:[#allocation4 + $0x28] sm:$0xff]
    %v150 = vld [vmem:[#allocation4 + $0x30] sm:$0xff]
    %v151 = vld [vmem:[#allocation4 + $0x38] sm:$0xff]
    %v152 = vld [vmem:[#allocation4 + $0x40] sm:$0xff]
    %v153 = vld [vmem:[#allocation4 + $0x48] sm:$0xff]
    %v154 = vld [vmem:[#allocation4 + $0x50] sm:$0xff]
    %v155 = vld [vmem:[#allocation4 + $0x58] sm:$0xff]
    %v156 = vld [vmem:[#allocation4 + $0x60] sm:$0xff]
    %v157 = vld [vmem:[#allocation4 + $0x68] sm:$0xff]
    %v158 = vld [vmem:[#allocation4 + $0x70] sm:$0xff]
    %v159 = vld [vmem:[#allocation4 + $0x78] sm:$0xff]
    %v160 = vld [vmem:[%s6] sm:$0x1]
    %v162 = vperm.slane %v160, 0
    %164 = vmatpush.msra.mxu0 %v159
    %165 = vmatpush.msra.mxu0 %v158
    %166 = vmatpush.msra.mxu0 %v157
    %167 = vmatpush.msra.mxu0 %v156
    %168 = vmatpush.msra.mxu0 %v155
    %169 = vmatpush.msra.mxu0 %v154
    %170 = vmatpush.msra.mxu0 %v153
    %171 = vmatpush.msra.mxu0 %v152
    %172 = vmatpush.msra.mxu0 %v151
    %173 = vmatpush.msra.mxu0 %v150
    %174 = vmatpush.msra.mxu0 %v149
    %175 = vmatpush.msra.mxu0 %v148
    %176 = vmatpush.msra.mxu0 %v147
    %177 = vmatpush.msra.mxu0 %v146
    %178 = vmatpush.msra.mxu0 %v145
    %179 = vmatpush.msra.mxu0 %v144
    %180 = vmatmul.f32.gmra.mxu0 %v142
    %v181 = vpop.f32.mrf.mxu0
    %v182 = vadd.f32 %v162, %v181
    %183 = vmatmul.f32.gmra.mxu0 %v143
    %v184 = vpop.f32.mrf.mxu0
    %v185 = vadd.f32 %v162, %v184
    %186 = vdwg.mxu0
    %187 = vst [vmem:[%s7] sm:$0xff] %v182
    %188 = vst [vmem:[%s7 + $0x8] sm:$0xff] %v185
    // Predicated region
    $region38: #{_forward_jit.1} parent=1 // pred_check
      _
    $region39: #{_forward_jit.1} parent=1 // pred_check_branch
      %190 = sbr.rel (0) target = $region41
    $region40: #{_forward_jit.1} parent=1 // pred_region
      _
    $region41: #{_forward_jit.1} parent=1 // pred_fallthru
      _
    // Predicated region
    $region42: #{_forward_jit.1} parent=1 // pred_check
      _
    $region43: #{_forward_jit.1} parent=1 // pred_check_branch
      %192 = sbr.rel (0) target = $region45
    $region44: #{_forward_jit.1} parent=1 // pred_region
      _
    $region45: #{_forward_jit.1} parent=1 // pred_fallthru
      _
    %193 = vsyncpa [#allocation3], 1
    %194 = vsyncpa [#allocation5], 1

</llo_original>
